<compile_context>
chip_gen: v7x
topology: tpu7x:2x2x1
jax: 0.10.0
libtpu: 0.0.40
codegen_flags: <defaults>
</compile_context>

<pallas_src>
import functools

import jax
import jax.numpy as jnp
from jax import lax
from jax.experimental import pallas as pl
from jax.experimental.pallas import tpu as pltpu

_NEG_BIG = -1e30  # bias used for padded vocab columns (never wins the max)


def _round_up(n: int, m: int) -> int:
    return ((n + m - 1) // m) * m


def _logits_lse_kernel(x_ref, w_ref, b_ref, logits_ref, lse_ref, m_sc, l_sc):
    """Grid (M tiles, N tiles); the vocab (N) axis is the reduction axis."""
    j = pl.program_id(1)

    @pl.when(j == 0)
    def _init():
        m_sc[...] = jnp.full_like(m_sc, -jnp.inf)
        l_sc[...] = jnp.zeros_like(l_sc)

    # x_ref: (tm, d_model), w_ref: (tn, d_model) -- PyTorch Linear layout,
    # contracted on d_model (no wrapper-side transpose of the weight).
    logits = lax.dot_general(
        x_ref[...],
        w_ref[...],
        dimension_numbers=(((1,), (1,)), ((), ())),
        preferred_element_type=jnp.float32,
    )
    logits = logits + b_ref[...]          # bias fused into the logit tile

    logits_ref[...] = logits              # f32 logit tile -> HBM

    # Online log-sum-exp accumulation across vocab tiles.
    m_prev = m_sc[...]
    m_new = jnp.maximum(m_prev, jnp.max(logits, axis=-1, keepdims=True))
    l_sc[...] = l_sc[...] * jnp.exp(m_prev - m_new) + jnp.sum(
        jnp.exp(logits - m_new), axis=-1, keepdims=True
    )
    m_sc[...] = m_new

    @pl.when(j == pl.num_programs(1) - 1)
    def _finalize():
        lse_ref[...] = m_sc[...] + jnp.log(l_sc[...])


def _normalize_kernel(logits_ref, lse_ref, o_ref):
    o_ref[...] = (logits_ref[...] - lse_ref[...]).astype(o_ref.dtype)


@functools.partial(jax.jit, static_argnames=("tm", "tn", "matmul_dtype"))
def prediction_layer(x, weight, bias, *, tm=128, tn=512, matmul_dtype=None):
    """log_softmax(x @ weight.T + bias, axis=-1)

    x:      (..., d_model)
    weight: (vocab, d_model)   -- PyTorch nn.Linear convention (NOT transposed)
    bias:   (vocab,)
    matmul_dtype: e.g. jnp.bfloat16 for the fast MXU path (accumulation and
                  softmax math stay float32).
    """
    d_model = x.shape[-1]
    vocab = weight.shape[0]
    lead_shape = x.shape[:-1]
    out_dtype = x.dtype

    x2d = x.reshape(-1, d_model)
    M = x2d.shape[0]

    # Tile sizes clamped to the (padded) problem, keeping (8, 128) alignment.
    tm_eff = min(tm, _round_up(max(M, 1), 8))
    tn_eff = min(tn, _round_up(vocab, 128))
    Mp = _round_up(M, tm_eff)
    Vp = _round_up(vocab, tn_eff)

    if matmul_dtype is not None:
        x2d = x2d.astype(matmul_dtype)
        weight = weight.astype(matmul_dtype)

    # Pad rows with zeros; pad vocab columns with zero weights and a hugely
    # negative bias so they never contribute to the log-sum-exp.
    x_p = jnp.pad(x2d, ((0, Mp - M), (0, 0)))
    w_p = jnp.pad(weight, ((0, Vp - vocab), (0, 0)))
    b_p = jnp.pad(
        bias.astype(jnp.float32), ((0, Vp - vocab),), constant_values=_NEG_BIG
    ).reshape(1, Vp)

    grid = (Mp // tm_eff, Vp // tn_eff)

    logits, lse = pl.pallas_call(
        _logits_lse_kernel,
        out_shape=(
            jax.ShapeDtypeStruct((Mp, Vp), jnp.float32),
            jax.ShapeDtypeStruct((Mp, 1), jnp.float32),
        ),
        grid_spec=pltpu.PrefetchScalarGridSpec(
            num_scalar_prefetch=0,
            grid=grid,
            in_specs=[
                pl.BlockSpec((tm_eff, d_model), lambda i, j: (i, 0)),
                pl.BlockSpec((tn_eff, d_model), lambda i, j: (j, 0)),
                pl.BlockSpec((1, tn_eff), lambda i, j: (0, j)),
            ],
            out_specs=(
                pl.BlockSpec((tm_eff, tn_eff), lambda i, j: (i, j)),
                pl.BlockSpec((tm_eff, 1), lambda i, j: (i, 0)),
            ),
            scratch_shapes=[
                pltpu.VMEM((tm_eff, 1), jnp.float32),  # running max
                pltpu.VMEM((tm_eff, 1), jnp.float32),  # running sum
            ],
        ),
        compiler_params=pltpu.CompilerParams(
            dimension_semantics=("parallel", "arbitrary"),
            vmem_limit_bytes=48 * 1024 * 1024,  # sized for v7x's 64 MiB VMEM
        ),
    )(x_p, w_p, b_p)

    out = pl.pallas_call(
        _normalize_kernel,
        out_shape=jax.ShapeDtypeStruct((Mp, Vp), out_dtype),
        grid_spec=pltpu.PrefetchScalarGridSpec(
            num_scalar_prefetch=0,
            grid=grid,
            in_specs=[
                pl.BlockSpec((tm_eff, tn_eff), lambda i, j: (i, j)),
                pl.BlockSpec((tm_eff, 1), lambda i, j: (i, 0)),
            ],
            out_specs=pl.BlockSpec((tm_eff, tn_eff), lambda i, j: (i, j)),
        ),
        compiler_params=pltpu.CompilerParams(
            dimension_semantics=("parallel", "parallel"),
            vmem_limit_bytes=48 * 1024 * 1024,
        ),
    )(logits, lse)

    return out[:M, :vocab].reshape(*lead_shape, vocab)


if __name__ == "__main__":
    # Small shapes: batch=2, seq=8, d_model=32, vocab=128
    batch, seq, d_model, vocab = 2, 8, 32, 128

    key = jax.random.PRNGKey(0)
    kx, kw, kb = jax.random.split(key, 3)

    x = jax.random.normal(kx, (batch, seq, d_model), dtype=jnp.float32)
    # Deterministic parameter init (mimics nn.Linear's uniform(-1/sqrt(d), 1/sqrt(d)))
    bound = 1.0 / jnp.sqrt(jnp.float32(d_model))
    weight = jax.random.uniform(
        kw, (vocab, d_model), minval=-bound, maxval=bound, dtype=jnp.float32
    )
    bias = jax.random.uniform(
        kb, (vocab,), minval=-bound, maxval=bound, dtype=jnp.float32
    )

    # f32 path.
    out = prediction_layer(x, weight, bias)
    jax.block_until_ready(out)

    # Reference in plain JAX.
    ref = jax.nn.log_softmax(x @ weight.T + bias, axis=-1)
    assert out.shape == (batch, seq, vocab)
    assert jnp.allclose(out, ref, atol=1e-4, rtol=1e-4)

    # bf16 matmul fast path (v5e/v6e/v7x MXU); softmax still f32, loose tolerance.
    out_bf16 = prediction_layer(x, weight, bias, matmul_dtype=jnp.bfloat16)
    jax.block_until_ready(out_bf16)
    assert out_bf16.shape == (batch, seq, vocab)
    assert jnp.allclose(out_bf16, ref, atol=5e-2, rtol=0)

    print("KERNEL_OK")
</pallas_src>

<mosaic_0001>
module attributes {stable_mosaic.version = 11 : i64} {
  func.func @_normalize_kernel(%arg0: i32, %arg1: i32, %arg2: memref<16x128xf32, #tpu.memory_space<vmem>>, %arg3: memref<16x1xf32, #tpu.memory_space<vmem>>, %arg4: memref<16x128xf32, #tpu.memory_space<vmem>>) attributes {dimension_semantics = [#tpu.dimension_semantics<parallel>, #tpu.dimension_semantics<parallel>], iteration_bounds = array<i64: 1, 1>, scalar_prefetch = 0 : i64, scratch_operands = 0 : i64, tpu.core_type = #tpu.core_type<tc>, window_params = [{transform_indices = @transform_0, window_bounds = array<i64: 16, 128>}, {transform_indices = @transform_1, window_bounds = array<i64: 16, 1>}, {transform_indices = @transform_2, window_bounds = array<i64: 16, 128>}]} {
    %c0 = arith.constant 0 : index
    %c0_0 = arith.constant 0 : index
    %0 = vector.load %arg2[%c0, %c0_0] : memref<16x128xf32, #tpu.memory_space<vmem>>, vector<16x128xf32>
    %c0_1 = arith.constant 0 : index
    %c0_2 = arith.constant 0 : index
    %1 = vector.load %arg3[%c0_1, %c0_2] : memref<16x1xf32, #tpu.memory_space<vmem>>, vector<16x1xf32>
    %2 = vector.broadcast %1 : vector<16x1xf32> to vector<16x128xf32>
    %3 = arith.subf %0, %2 : vector<16x128xf32>
    %c0_3 = arith.constant 0 : index
    %c0_4 = arith.constant 0 : index
    %4 = vector.load %arg4[%c0_3, %c0_4] : memref<16x128xf32, #tpu.memory_space<vmem>>, vector<16x128xf32>
    tpu.vector_store %arg4[%c0_3, %c0_4], %3 {strides = array<i32>} : memref<16x128xf32, #tpu.memory_space<vmem>>, vector<16x128xf32>,
    return
  }
  func.func @transform_0(%arg0: i32, %arg1: i32) -> (i32, i32) {
    %c0_i32 = arith.constant 0 : i32
    return %arg0, %arg1 : i32, i32
  }
  func.func @transform_1(%arg0: i32, %arg1: i32) -> (i32, i32) {
    %c0_i32 = arith.constant 0 : i32
    %c0_i32_0 = arith.constant 0 : i32
    return %arg0, %c0_i32 : i32, i32
  }
  func.func @transform_2(%arg0: i32, %arg1: i32) -> (i32, i32) {
    %c0_i32 = arith.constant 0 : i32
    return %arg0, %arg1 : i32, i32
  }
}

module attributes {stable_mosaic.version = 11 : i64} {
  func.func @_logits_lse_kernel(%arg0: i32, %arg1: i32, %arg2: memref<16x32xf32, #tpu.memory_space<vmem>>, %arg3: memref<128x32xf32, #tpu.memory_space<vmem>>, %arg4: memref<1x128xf32, #tpu.memory_space<vmem>>, %arg5: memref<16x128xf32, #tpu.memory_space<vmem>>, %arg6: memref<16x1xf32, #tpu.memory_space<vmem>>, %arg7: memref<16x1xf32, #tpu.memory_space<vmem>>, %arg8: memref<16x1xf32, #tpu.memory_space<vmem>>) attributes {dimension_semantics = [#tpu.dimension_semantics<parallel>, #tpu.dimension_semantics<arbitrary>], iteration_bounds = array<i64: 1, 1>, scalar_prefetch = 0 : i64, scratch_operands = 2 : i64, tpu.core_type = #tpu.core_type<tc>, window_params = [{transform_indices = @transform_0, window_bounds = array<i64: 16, 32>}, {transform_indices = @transform_1, window_bounds = array<i64: 128, 32>}, {transform_indices = @transform_2, window_bounds = array<i64: 1, 128>}, {transform_indices = @transform_3, window_bounds = array<i64: 16, 128>}, {transform_indices = @transform_4, window_bounds = array<i64: 16, 1>}]} {
    %c0_i32 = arith.constant 0 : i32
    %0 = arith.cmpi eq, %arg1, %c0_i32 : i32
    %1 = arith.extui %0 : i1 to i32
    %c0_i32_0 = arith.constant 0 : i32
    %2 = arith.cmpi ne, %1, %c0_i32_0 : i32
    scf.if %2 {
      %cst_20 = arith.constant 0xFF800000 : f32
      %29 = vector.broadcast %cst_20 : f32 to vector<16x1xf32>
      %c0_21 = arith.constant 0 : index
      %c0_22 = arith.constant 0 : index
      %30 = vector.load %arg7[%c0_21, %c0_22] : memref<16x1xf32, #tpu.memory_space<vmem>>, vector<16x1xf32>
      tpu.vector_store %arg7[%c0_21, %c0_22], %29 {strides = array<i32>} : memref<16x1xf32, #tpu.memory_space<vmem>>, vector<16x1xf32>,
      %cst_23 = arith.constant 0.000000e+00 : f32
      %31 = vector.broadcast %cst_23 : f32 to vector<16x1xf32>
      %c0_24 = arith.constant 0 : index
      %c0_25 = arith.constant 0 : index
      %32 = vector.load %arg8[%c0_24, %c0_25] : memref<16x1xf32, #tpu.memory_space<vmem>>, vector<16x1xf32>
      tpu.vector_store %arg8[%c0_24, %c0_25], %31 {strides = array<i32>} : memref<16x1xf32, #tpu.memory_space<vmem>>, vector<16x1xf32>,
    } else {
    }
    %c0 = arith.constant 0 : index
    %c0_1 = arith.constant 0 : index
    %3 = vector.load %arg2[%c0, %c0_1] : memref<16x32xf32, #tpu.memory_space<vmem>>, vector<16x32xf32>
    %c0_2 = arith.constant 0 : index
    %c0_3 = arith.constant 0 : index
    %4 = vector.load %arg3[%c0_2, %c0_3] : memref<128x32xf32, #tpu.memory_space<vmem>>, vector<128x32xf32>
    %cst = arith.constant dense<0.000000e+00> : vector<16x128xf32>
    %5 = tpu.matmul %3, %4, %cst {dimension_numbers = #tpu.dot_dimension_numbers<[1], [1], [0], [0], [0, 0, 1, 0], [], []>} : vector<16x32xf32>, vector<128x32xf32>, vector<16x128xf32> -> vector<16x128xf32>
    %c0_4 = arith.constant 0 : index
    %c0_5 = arith.constant 0 : index
    %6 = vector.load %arg4[%c0_4, %c0_5] : memref<1x128xf32, #tpu.memory_space<vmem>>, vector<1x128xf32>
    %7 = vector.broadcast %6 : vector<1x128xf32> to vector<16x128xf32>
    %8 = arith.addf %5, %7 : vector<16x128xf32>
    %c0_6 = arith.constant 0 : index
    %c0_7 = arith.constant 0 : index
    %9 = vector.load %arg5[%c0_6, %c0_7] : memref<16x128xf32, #tpu.memory_space<vmem>>, vector<16x128xf32>
    tpu.vector_store %arg5[%c0_6, %c0_7], %8 {strides = array<i32>} : memref<16x128xf32, #tpu.memory_space<vmem>>, vector<16x128xf32>,
    %c0_8 = arith.constant 0 : index
    %c0_9 = arith.constant 0 : index
    %10 = vector.load %arg7[%c0_8, %c0_9] : memref<16x1xf32, #tpu.memory_space<vmem>>, vector<16x1xf32>
    %cst_10 = arith.constant dense<0xFF800000> : vector<16xf32>
    %11 = vector.multi_reduction <maximumf>, %8, %cst_10 [1] : vector<16x128xf32> to vector<16xf32>
    %12 = vector.shape_cast %11 : vector<16xf32> to vector<16x1xf32>
    %13 = arith.maximumf %10, %12 : vector<16x1xf32>
    %c0_11 = arith.constant 0 : index
    %c0_12 = arith.constant 0 : index
    %14 = vector.load %arg8[%c0_11, %c0_12] : memref<16x1xf32, #tpu.memory_space<vmem>>, vector<16x1xf32>
    %15 = arith.subf %10, %13 : vector<16x1xf32>
    %16 = math.exp %15 : vector<16x1xf32>
    %17 = arith.mulf %14, %16 : vector<16x1xf32>
    %18 = vector.broadcast %13 : vector<16x1xf32> to vector<16x128xf32>
    %19 = arith.subf %8, %18 : vector<16x128xf32>
    %20 = math.exp %19 : vector<16x128xf32>
    %cst_13 = arith.constant dense<0.000000e+00> : vector<16xf32>
    %21 = vector.multi_reduction <add>, %20, %cst_13 [1] : vector<16x128xf32> to vector<16xf32>
    %22 = vector.shape_cast %21 : vector<16xf32> to vector<16x1xf32>
    %23 = arith.addf %17, %22 : vector<16x1xf32>
    %c0_14 = arith.constant 0 : index
    %c0_15 = arith.constant 0 : index
    %24 = vector.load %arg8[%c0_14, %c0_15] : memref<16x1xf32, #tpu.memory_space<vmem>>, vector<16x1xf32>
    tpu.vector_store %arg8[%c0_14, %c0_15], %23 {strides = array<i32>} : memref<16x1xf32, #tpu.memory_space<vmem>>, vector<16x1xf32>,
    %c0_16 = arith.constant 0 : index
    %c0_17 = arith.constant 0 : index
    %25 = vector.load %arg7[%c0_16, %c0_17] : memref<16x1xf32, #tpu.memory_space<vmem>>, vector<16x1xf32>
    tpu.vector_store %arg7[%c0_16, %c0_17], %13 {strides = array<i32>} : memref<16x1xf32, #tpu.memory_space<vmem>>, vector<16x1xf32>,
    %c0_i32_18 = arith.constant 0 : i32
    %26 = arith.cmpi eq, %arg1, %c0_i32_18 : i32
    %27 = arith.extui %26 : i1 to i32
    %c0_i32_19 = arith.constant 0 : i32
    %28 = arith.cmpi ne, %27, %c0_i32_19 : i32
    scf.if %28 {
      %c0_20 = arith.constant 0 : index
      %c0_21 = arith.constant 0 : index
      %29 = vector.load %arg7[%c0_20, %c0_21] : memref<16x1xf32, #tpu.memory_space<vmem>>, vector<16x1xf32>
      %c0_22 = arith.constant 0 : index
      %c0_23 = arith.constant 0 : index
      %30 = vector.load %arg8[%c0_22, %c0_23] : memref<16x1xf32, #tpu.memory_space<vmem>>, vector<16x1xf32>
      %31 = math.log %30 : vector<16x1xf32>
      %32 = arith.addf %29, %31 : vector<16x1xf32>
      %c0_24 = arith.constant 0 : index
      %c0_25 = arith.constant 0 : index
      %33 = vector.load %arg6[%c0_24, %c0_25] : memref<16x1xf32, #tpu.memory_space<vmem>>, vector<16x1xf32>
      tpu.vector_store %arg6[%c0_24, %c0_25], %32 {strides = array<i32>} : memref<16x1xf32, #tpu.memory_space<vmem>>, vector<16x1xf32>,
    } else {
    }
    return
  }
  func.func @transform_0(%arg0: i32, %arg1: i32) -> (i32, i32) {
    %c0_i32 = arith.constant 0 : i32
    %c0_i32_0 = arith.constant 0 : i32
    return %arg0, %c0_i32 : i32, i32
  }
  func.func @transform_1(%arg0: i32, %arg1: i32) -> (i32, i32) {
    %c0_i32 = arith.constant 0 : i32
    %c0_i32_0 = arith.constant 0 : i32
    return %arg1, %c0_i32 : i32, i32
  }
  func.func @transform_2(%arg0: i32, %arg1: i32) -> (i32, i32) {
    %c0_i32 = arith.constant 0 : i32
    %c0_i32_0 = arith.constant 0 : i32
    return %c0_i32, %arg1 : i32, i32
  }
  func.func @transform_3(%arg0: i32, %arg1: i32) -> (i32, i32) {
    %c0_i32 = arith.constant 0 : i32
    return %arg0, %arg1 : i32, i32
  }
  func.func @transform_4(%arg0: i32, %arg1: i32) -> (i32, i32) {
    %c0_i32 = arith.constant 0 : i32
    %c0_i32_0 = arith.constant 0 : i32
    return %arg0, %c0_i32 : i32, i32
  }
}

</mosaic_0001>

<llo_original>
// kernel: prediction_layer.3
$region0: #{prediction_layer.3}
  #allocation0 [shape = 'u32[]', space=smem, size = 0x4, offset = 0x4, fixed_abs, tag = 'smem constant byte address 0x4 - core index']
  #allocation1 [shape = 'u32[144,128]{1,0:T(1,128)}', space=vmem, size = 0x12000, scoped, tag = 'internal scratch']
  %s0 = inlined_call_operand.vmem [shape: f32[16,128], index: 0, kind: input, shape index: {}]
  %s1 = inlined_call_operand.vmem [shape: f32[16,1], index: 1, kind: input, shape index: {}]
  %s2 = inlined_call_operand.hbm [shape: f32[16,128], index: 2, kind: output, shape index: {}]
  %s3 = sld [smem:[#allocation0]]
  $region18: #{prediction_layer.3} parent=0
    _
  %s5 = ssub.s32 1, %s3
  %s6 = scalar_select 0, %s5, %s3
  $region1: #{prediction_layer.3} parent=0
    #allocation2 [shape = 'u8[8192]{0}', space=vmem, size = 0x2000, scoped, tag = 'output window, operand 0, single buffered']
    #allocation3 [shape = 's32[1]{0}', space=sflag, size = 0x4, scoped, tag = 'scoped memory for prediction_layer.3']
    %7 = vsyncpa [#allocation3], 0
    // Predicated region
    $region2: #{prediction_layer.3} parent=1 // pred_check
      _
    $region3: #{prediction_layer.3} parent=1 // pred_check_branch
      %9 = sbr.rel (0) target = $region5
    $region4: #{prediction_layer.3} parent=1 // pred_region
      _
    $region5: #{prediction_layer.3} parent=1 // pred_fallthru
      _
    // Predicated region
    $region6: #{prediction_layer.3} parent=1 // pred_check
      _
    $region7: #{prediction_layer.3} parent=1 // pred_check_branch
      %11 = sbr.rel (0) target = $region9
    $region8: #{prediction_layer.3} parent=1 // pred_region
      _
    $region9: #{prediction_layer.3} parent=1 // pred_fallthru
      _
    %v12 = vld [vmem:[%s0] sm:$0xff]
    %v13 = vld [vmem:[%s0 + $0x8] sm:$0xff]
    %v14 = vld [vmem:[%s1] sm:$0xff]
    %v15 = vld [vmem:[%s1 + $0x8] sm:$0xff]
    %17 = vset.pattern.permute.xlu0 0
    %18 = vperm.xlu0 %17, %v14
    %v19 = vpop.permute.xlu0 %18
    %22 = vset.pattern.permute.xlu0 0
    %23 = vperm.xlu0 %22, %v15
    %v24 = vpop.permute.xlu0 %23
    %v26 = vsub.f32 %v12, %v19
    %v27 = vsub.f32 %v13, %v24
    %28 = vst [vmem:[#allocation2] sm:$0xff] %v26
    %29 = vst [vmem:[#allocation2 + $0x8] sm:$0xff] %v27
    // Predicated region
    $region10: #{prediction_layer.3} parent=1 // pred_check
      _
    $region11: #{prediction_layer.3} parent=1 // pred_check_branch
      %31 = sbr.rel (0) target = $region13
    $region12: #{prediction_layer.3} parent=1 // pred_region
      %s33 = ssub.s32 256, 256
      %34 = vsyncadd [#allocation3], %s33
      %s35 = sshll.u32 [#allocation2], 4
      %s36 = int_to_ptr.vmem [resolvable:$true] %s35
      %41 = dma.vmem_to_hbm [thread:$0]  %s36, 256, %s2, [#allocation3], 128, 128, 8
    $region13: #{prediction_layer.3} parent=1 // pred_fallthru
      _
    // Predicated region
    $region14: #{prediction_layer.3} parent=1 // pred_check
      _
    $region15: #{prediction_layer.3} parent=1 // pred_check_branch
      %43 = sbr.rel (0) target = $region17
    $region16: #{prediction_layer.3} parent=1 // pred_region
      %44 = dma.done [#allocation3], 256
    $region17: #{prediction_layer.3} parent=1 // pred_fallthru
      _
    %45 = vsyncpa [#allocation3], 1

// kernel: prediction_layer.2
$region0: #{prediction_layer.2}
  #allocation0 [shape = 'u32[]', space=smem, size = 0x4, offset = 0x4, fixed_abs, tag = 'smem constant byte address 0x4 - core index']
  #allocation1 [shape = 'u32[144,128]{1,0:T(1,128)}', space=vmem, size = 0x12000, scoped, tag = 'internal scratch']
  #allocation2 [shape = 'f32[16,1]{1,0:T(8,128)}', space=vmem, size = 0x2000, scoped, tag = 'scratch operand']
  #allocation3 [shape = 'f32[16,1]{1,0:T(8,128)}', space=vmem, size = 0x2000, scoped, tag = 'scratch operand']
  %s0 = inlined_call_operand.vmem [shape: f32[16,32], index: 0, kind: input, shape index: {}]
  %s1 = inlined_call_operand.vmem [shape: f32[128,32], index: 1, kind: input, shape index: {}]
  %s2 = inlined_call_operand.vmem [shape: f32[1,128], index: 2, kind: input, shape index: {}]
  %s3 = inlined_call_operand.vmem [shape: f32[16,128], index: 3, kind: output, shape index: {0}]
  %s4 = inlined_call_operand.vmem [shape: f32[16,1], index: 4, kind: output, shape index: {1}]
  %5 = xla_tuple %s3, %s4
  %s6 = sld [smem:[#allocation0]]
  $region38: #{prediction_layer.2} parent=0
    _
  %s8 = ssub.s32 1, %s6
  %s9 = scalar_select 0, %s8, %s6
  // Predicated region
  $region2: #{prediction_layer.2} parent=0 // pred_check
    _
  $region3: #{prediction_layer.2} parent=0 // pred_check_branch
    %11 = sbr.rel (0) target = $region5
  $region4: #{prediction_layer.2} parent=0 // pred_region
    _
  $region5: #{prediction_layer.2} parent=0 // pred_fallthru
    _
  // Predicated region
  $region6: #{prediction_layer.2} parent=0 // pred_check
    _
  $region7: #{prediction_layer.2} parent=0 // pred_check_branch
    %13 = sbr.rel (0) target = $region9
  $region8: #{prediction_layer.2} parent=0 // pred_region
    _
  $region9: #{prediction_layer.2} parent=0 // pred_fallthru
    _
  // Predicated region
  $region10: #{prediction_layer.2} parent=0 // pred_check
    _
  $region11: #{prediction_layer.2} parent=0 // pred_check_branch
    %15 = sbr.rel (0) target = $region13
  $region12: #{prediction_layer.2} parent=0 // pred_region
    _
  $region13: #{prediction_layer.2} parent=0 // pred_fallthru
    _
  %p16 = scmp.eq.s32.totalorder 0, 0
  // Predicated region
  $region14: #{prediction_layer.2} parent=0 // pred_check
    %p17 = pneg %p16
  $region15: #{prediction_layer.2} parent=0 // pred_check_branch
    %19 = sbr.rel (%p17) target = $region17
  $region16: #{prediction_layer.2} parent=0 // pred_region
    %vm20 = vcmask 7168
    %21 = vst.msk [vmem:[#allocation2] sm:$0xff] %vm20, -inf
    %22 = vst.msk [vmem:[#allocation2 + $0x8] sm:$0xff] %vm20, -inf
    %23 = vst.msk [vmem:[#allocation3] sm:$0xff] %vm20, 0.0
    %24 = vst.msk [vmem:[#allocation3 + $0x8] sm:$0xff] %vm20, 0.0
  $region17: #{prediction_layer.2} parent=0 // pred_fallthru
    _
  %v25 = vld [vmem:[%s0] sm:$0xff]
  %v26 = vld [vmem:[%s0 + $0x8] sm:$0xff]
  %v27 = vld [vmem:[%s1] sm:$0xff]
  %v28 = vld [vmem:[%s1 + $0x8] sm:$0xff]
  %v29 = vld [vmem:[%s1 + $0x10] sm:$0xff]
  %v30 = vld [vmem:[%s1 + $0x18] sm:$0xff]
  %v31 = vld [vmem:[%s1 + $0x20] sm:$0xff]
  %v32 = vld [vmem:[%s1 + $0x28] sm:$0xff]
  %v33 = vld [vmem:[%s1 + $0x30] sm:$0xff]
  %v34 = vld [vmem:[%s1 + $0x38] sm:$0xff]
  %v35 = vld [vmem:[%s1 + $0x40] sm:$0xff]
  %v36 = vld [vmem:[%s1 + $0x48] sm:$0xff]
  %v37 = vld [vmem:[%s1 + $0x50] sm:$0xff]
  %v38 = vld [vmem:[%s1 + $0x58] sm:$0xff]
  %v39 = vld [vmem:[%s1 + $0x60] sm:$0xff]
  %v40 = vld [vmem:[%s1 + $0x68] sm:$0xff]
  %v41 = vld [vmem:[%s1 + $0x70] sm:$0xff]
  %v42 = vld [vmem:[%s1 + $0x78] sm:$0xff]
  %v43 = vld [vmem:[%s2] sm:$0x1]
  %v45 = vlaneseq
  %v46 = vshrl.u32 %v45, 7
  %v47 = vsub.s32 0, %v46
  %v48 = vrot.slane %v43, %v47
  %vm50 = vcmask 261120
  %v52 = vsel %vm50, %v25, 0
  %v55 = vsel %vm50, %v26, 0
  %v58 = vsel %vm50, %v27, 0
  %v61 = vsel %vm50, %v28, 0
  %v64 = vsel %vm50, %v29, 0
  %v67 = vsel %vm50, %v30, 0
  %v70 = vsel %vm50, %v31, 0
  %v73 = vsel %vm50, %v32, 0
  %v76 = vsel %vm50, %v33, 0
  %v79 = vsel %vm50, %v34, 0
  %v82 = vsel %vm50, %v35, 0
  %v85 = vsel %vm50, %v36, 0
  %v88 = vsel %vm50, %v37, 0
  %v91 = vsel %vm50, %v38, 0
  %v94 = vsel %vm50, %v39, 0
  %v97 = vsel %vm50, %v40, 0
  %v100 = vsel %vm50, %v41, 0
  %v103 = vsel %vm50, %v42, 0
  %105 = vmatprep.subr.mxu0 0.0
  %106 = vmatpush1.xpose.msra.mxu0 %v58
  %107 = vmatprep.subr.mxu0 0.0
  %108 = vmatpush1.xpose.msra.mxu0 %v61
  %109 = vmatprep.subr.mxu0 0.0
  %110 = vmatpush1.xpose.msra.mxu0 %v64
  %111 = vmatprep.subr.mxu0 0.0
  %112 = vmatpush1.xpose.msra.mxu0 %v67
  %113 = vmatprep.subr.mxu0 0.0
  %114 = vmatpush1.xpose.msra.mxu0 %v70
  %115 = vmatprep.subr.mxu0 0.0
  %116 = vmatpush1.xpose.msra.mxu0 %v73
  %117 = vmatprep.subr.mxu0 0.0
  %118 = vmatpush1.xpose.msra.mxu0 %v76
  %119 = vmatprep.subr.mxu0 0.0
  %120 = vmatpush1.xpose.msra.mxu0 %v79
  %121 = vmatprep.subr.mxu0 0.0
  %122 = vmatpush1.xpose.msra.mxu0 %v82
  %123 = vmatprep.subr.mxu0 0.0
  %124 = vmatpush1.xpose.msra.mxu0 %v85
  %125 = vmatprep.subr.mxu0 0.0
  %126 = vmatpush1.xpose.msra.mxu0 %v88
  %127 = vmatprep.subr.mxu0 0.0
  %128 = vmatpush1.xpose.msra.mxu0 %v91
  %129 = vmatprep.subr.mxu0 0.0
  %130 = vmatpush1.xpose.msra.mxu0 %v94
  %131 = vmatprep.subr.mxu0 0.0
  %132 = vmatpush1.xpose.msra.mxu0 %v97
  %133 = vmatprep.subr.mxu0 0.0
  %134 = vmatpush1.xpose.msra.mxu0 %v100
  %135 = vmatprep.subr.mxu0 0.0
  %136 = vmatpush1.xpose.msra.mxu0 %v103
  %137 = vmatprep.subr.mxu0 0.0
  %138 = vmatpush1.xpose.msra.mxu0 0.0
  %139 = vmatprep.subr.mxu0 0.0
  %140 = vmatpush1.xpose.msra.mxu0 0.0
  %141 = vmatprep.subr.mxu0 0.0
  %142 = vmatpush1.xpose.msra.mxu0 0.0
  %143 = vmatprep.subr.mxu0 0.0
  %144 = vmatpush1.xpose.msra.mxu0 0.0
  %145 = vmatprep.subr.mxu0 0.0
  %146 = vmatpush1.xpose.msra.mxu0 0.0
  %147 = vmatprep.subr.mxu0 0.0
  %148 = vmatpush1.xpose.msra.mxu0 0.0
  %149 = vmatprep.subr.mxu0 0.0
  %150 = vmatpush1.xpose.msra.mxu0 0.0
  %151 = vmatprep.subr.mxu0 0.0
  %152 = vmatpush1.xpose.msra.mxu0 0.0
  %153 = vmatprep.subr.mxu0 0.0
  %154 = vmatpush1.xpose.msra.mxu0 0.0
  %155 = vmatprep.subr.mxu0 0.0
  %156 = vmatpush1.xpose.msra.mxu0 0.0
  %157 = vmatprep.subr.mxu0 0.0
  %158 = vmatpush1.xpose.msra.mxu0 0.0
  %159 = vmatprep.subr.mxu0 0.0
  %160 = vmatpush1.xpose.msra.mxu0 0.0
  %161 = vmatprep.subr.mxu0 0.0
  %162 = vmatpush1.xpose.msra.mxu0 0.0
  %163 = vmatprep.subr.mxu0 0.0
  %164 = vmatpush1.xpose.msra.mxu0 0.0
  %165 = vmatprep.subr.mxu0 0.0
  %166 = vmatpush1.xpose.msra.mxu0 0.0
  %167 = vmatprep.subr.mxu0 0.0
  %168 = vmatpush1.xpose.msra.mxu0 0.0
  %169 = vmatprep.mubr.f32.mxu0 0.0
  %170 = vmatmul.mubr.f32.gmra.mrb[0].mxu0 %v52
  %v171 = vpop.f32.mrb[0].mxu0
  %v172 = vadd.f32 %v48, %v171
  %v173 = vpop.f32.mrb[0].mxu0
  %174 = vmatprep.mubr.f32.mxu0 0.0
  %175 = vmatmul.mubr.f32.gmra.mrb[0].mxu0 %v55
  %v176 = vpop.f32.mrb[0].mxu0
  %v177 = vadd.f32 %v48, %v176
  %v178 = vpop.f32.mrb[0].mxu0
  %179 = vdwg.mxu0
  %180 = vst [vmem:[%s3] sm:$0xff] %v172
  %181 = vst [vmem:[%s3 + $0x8] sm:$0xff] %v177
  %v182 = vld [vmem:[#allocation2] sm:$0xff]
  %v183 = vld [vmem:[#allocation2 + $0x8] sm:$0xff]
  %184 = vmax.xlane.f32.xlu0 %v172
  %v185 = vpop.xlane.xlu0 %184
  %186 = vmax.xlane.f32.xlu0 %v177
  %v187 = vpop.xlane.xlu0 %186
  %v188 = vmax.f32 %v182, %v185
  %v189 = vmax.f32 %v183, %v187
  %v190 = vld [vmem:[#allocation3] sm:$0xff]
  %v191 = vld [vmem:[#allocation3 + $0x8] sm:$0xff]
  %v192 = vsub.f32 %v182, %v188
  %v193 = vsub.f32 %v183, %v189
  %v194 = vmul.f32 %v192, 1.442695
  %v195 = vpow.pop %v194
  %v196 = vmul.f32 %v193, 1.442695
  %v197 = vpow.pop %v196
  %v198 = vmul.f32 %v190, %v195
  %v199 = vmul.f32 %v191, %v197
  %201 = vset.pattern.permute.xlu0 0
  %202 = vperm.xlu0 %201, %v188
  %v203 = vpop.permute.xlu0 %202
  %206 = vset.pattern.permute.xlu0 0
  %207 = vperm.xlu0 %206, %v189
  %v208 = vpop.permute.xlu0 %207
  %v210 = vsub.f32 %v172, %v203
  %v211 = vsub.f32 %v177, %v208
  %v212 = vmul.f32 %v210, 1.442695
  %v213 = vpow.pop %v212
  %v214 = vmul.f32 %v211, 1.442695
  %v215 = vpow.pop %v214
  %216 = vadd.xlane.f32.xlu0 %v213
  %v217 = vpop.xlane.xlu0 %216
  %218 = vadd.xlane.f32.xlu0 %v215
  %v219 = vpop.xlane.xlu0 %218
  %v220 = vadd.f32 %v198, %v217
  %v221 = vadd.f32 %v199, %v219
  %vm222 = vcmask 7168
  %223 = vst.msk [vmem:[#allocation3] sm:$0xff] %vm222, %v220
  %224 = vst.msk [vmem:[#allocation3 + $0x8] sm:$0xff] %vm222, %v221
  %225 = vst.msk [vmem:[#allocation2] sm:$0xff] %vm222, %v188
  %226 = vst.msk [vmem:[#allocation2 + $0x8] sm:$0xff] %vm222, %v189
  // Predicated region
  $region18: #{prediction_layer.2} parent=0 // pred_check
    %p227 = pneg %p16
  $region19: #{prediction_layer.2} parent=0 // pred_check_branch
    %229 = sbr.rel (%p227) target = $region21
  $region20: #{prediction_layer.2} parent=0 // pred_region
    %v230 = vld [vmem:[#allocation2] sm:$0xff]
    %v231 = vld [vmem:[#allocation2 + $0x8] sm:$0xff]
    %v232 = vld [vmem:[#allocation3] sm:$0xff]
    %v233 = vld [vmem:[#allocation3 + $0x8] sm:$0xff]
    %v234 = vlog2.pop %v232
    %v235 = vmul.f32 %v234, 0.6931472
    %v236 = vlog2.pop %v233
    %v237 = vmul.f32 %v236, 0.6931472
    %v238 = vadd.f32 %v230, %v235
    %v239 = vadd.f32 %v231, %v237
    %240 = vst.msk [vmem:[%s4] sm:$0xff] %vm222, %v238
    %241 = vst.msk [vmem:[%s4 + $0x8] sm:$0xff] %vm222, %v239
  $region21: #{prediction_layer.2} parent=0 // pred_fallthru
    _
  // Predicated region
  $region22: #{prediction_layer.2} parent=0 // pred_check
    _
  $region23: #{prediction_layer.2} parent=0 // pred_check_branch
    %243 = sbr.rel (0) target = $region25
  $region24: #{prediction_layer.2} parent=0 // pred_region
    _
  $region25: #{prediction_layer.2} parent=0 // pred_fallthru
    _
  // Predicated region
  $region26: #{prediction_layer.2} parent=0 // pred_check
    _
  $region27: #{prediction_layer.2} parent=0 // pred_check_branch
    %245 = sbr.rel (0) target = $region29
  $region28: #{prediction_layer.2} parent=0 // pred_region
    _
  $region29: #{prediction_layer.2} parent=0 // pred_fallthru
    _
  // Predicated region
  $region30: #{prediction_layer.2} parent=0 // pred_check
    _
  $region31: #{prediction_layer.2} parent=0 // pred_check_branch
    %247 = sbr.rel (0) target = $region33
  $region32: #{prediction_layer.2} parent=0 // pred_region
    _
  $region33: #{prediction_layer.2} parent=0 // pred_fallthru
    _
  // Predicated region
  $region34: #{prediction_layer.2} parent=0 // pred_check
    _
  $region35: #{prediction_layer.2} parent=0 // pred_check_branch
    %249 = sbr.rel (0) target = $region37
  $region36: #{prediction_layer.2} parent=0 // pred_region
    _
  $region37: #{prediction_layer.2} parent=0 // pred_fallthru
    _

</llo_original>
